<compile_context>
chip_gen: v7x
topology: tpu7x:2x2x1
jax: 0.10.0
libtpu: 0.0.40
codegen_flags: <defaults>
</compile_context>

<pallas_src>
import functools

import jax
import jax.numpy as jnp
from jax.experimental import pallas as pl
from jax.experimental.pallas import tpu as pltpu


# ---------------------------------------------------------------------------
# Compiler params / VMEM budget
# ---------------------------------------------------------------------------
def _vmem_limit_bytes():
    # Generation-aware budget: ~3/4 of physical VMEM, capped at 96 MiB (v5e/v6e have
    # 128 MiB, v7x has 64 MiB), floor of 32 MiB if the query is unavailable.
    try:
        cap = int(pltpu.get_tpu_info().vmem_capacity_bytes)
    except Exception:
        cap = 64 * 1024 * 1024
    return max(32 * 1024 * 1024, min(3 * cap // 4, 96 * 1024 * 1024))


def _compiler_params(dims):
    return pltpu.CompilerParams(dimension_semantics=dims,
                                vmem_limit_bytes=_vmem_limit_bytes())


# ---------------------------------------------------------------------------
# Kernel A: dilated 1-D conv (pre-reflect-padded input) + bias + ReLU + BN partial stats
# ---------------------------------------------------------------------------
def conv_relu_stats_kernel(x_ref, w_ref, b_ref, act_ref, stats_ref, win_ref,
                           *, K, dil, tt, T):
    Cin = x_ref.shape[-1]
    win_rows = win_ref.shape[0]

    j = pl.program_id(1)
    t0 = j * tt
    if tt % 8 == 0:
        t0 = pl.multiple_of(t0, 8)

    # One aligned dynamic-start copy of the (tt + halo) input window; all per-tap
    # accesses below are static slices of this scratch (robust, cheap).
    win_ref[...] = x_ref[0, pl.ds(t0, win_rows), :]

    # K accumulated MXU matmuls (bf16 operands, f32 accumulation) -- no im2col slab.
    acc = jnp.dot(win_ref[pl.ds(0, tt), :], w_ref[pl.ds(0, Cin), :],
                  preferred_element_type=jnp.float32)
    for k in range(1, K):
        acc = acc + jnp.dot(win_ref[pl.ds(k * dil, tt), :],
                            w_ref[pl.ds(k * Cin, Cin), :],
                            preferred_element_type=jnp.float32)

    act = jnp.maximum(acc + b_ref[...], 0.0)               # (tt, Cout) f32

    if T % tt != 0:
        # Ragged last time tile: keep padded rows out of the BN statistics.
        rows = jax.lax.broadcasted_iota(jnp.int32, (tt, 1), 0)
        act = jnp.where(rows < (T - t0), act, 0.0)

    act_ref[0] = act.astype(act_ref.dtype)                  # bf16 writeback

    psum = jnp.sum(act, axis=0, keepdims=True)
    psq = jnp.sum(act * act, axis=0, keepdims=True)

    @pl.when(j == 0)
    def _():
        stats_ref[0, 0:1, :] = psum
        stats_ref[0, 1:2, :] = psq

    @pl.when(j > 0)
    def _():
        stats_ref[0, 0:1, :] = stats_ref[0, 0:1, :] + psum
        stats_ref[0, 1:2, :] = stats_ref[0, 1:2, :] + psq


# ---------------------------------------------------------------------------
# Kernel A': ReLU + BN partial stats (reference's non-patchup branch skips the conv)
# ---------------------------------------------------------------------------
def relu_stats_kernel(x_ref, act_ref, stats_ref, *, tt, T):
    j = pl.program_id(1)
    act = jnp.maximum(x_ref[0].astype(jnp.float32), 0.0)
    if T % tt != 0:
        rows = jax.lax.broadcasted_iota(jnp.int32, (tt, 1), 0)
        act = jnp.where(rows < (T - j * tt), act, 0.0)
    act_ref[0] = act.astype(act_ref.dtype)

    psum = jnp.sum(act, axis=0, keepdims=True)
    psq = jnp.sum(act * act, axis=0, keepdims=True)

    @pl.when(j == 0)
    def _():
        stats_ref[0, 0:1, :] = psum
        stats_ref[0, 1:2, :] = psq

    @pl.when(j > 0)
    def _():
        stats_ref[0, 0:1, :] = stats_ref[0, 0:1, :] + psum
        stats_ref[0, 1:2, :] = stats_ref[0, 1:2, :] + psq


# ---------------------------------------------------------------------------
# Kernel B: BN apply with the (T, C) -> (C, T) output transpose fused in
# ---------------------------------------------------------------------------
def bn_apply_transpose_kernel(act_ref, scale_ref, shift_ref, o_ref):
    y = act_ref[0].astype(jnp.float32) * scale_ref[...] + shift_ref[...]   # (tt2, C)
    o_ref[0] = jnp.transpose(y, (1, 0))                                    # (C, tt2)


def bn_apply_kernel(act_ref, scale_ref, shift_ref, o_ref):
    o_ref[0] = act_ref[0].astype(jnp.float32) * scale_ref[...] + shift_ref[...]


# ---------------------------------------------------------------------------
# pallas_call wrappers
# ---------------------------------------------------------------------------
def _conv_relu_stats(x_pad, w_flat, bias, *, K, dil, tt, T, win_rows, act_dtype):
    B, Tp, Cin = x_pad.shape
    Cout = w_flat.shape[-1]
    nT = pl.cdiv(T, tt)
    kernel = functools.partial(conv_relu_stats_kernel, K=K, dil=dil, tt=tt, T=T)
    return pl.pallas_call(
        kernel,
        out_shape=(jax.ShapeDtypeStruct((B, T, Cout), act_dtype),
                   jax.ShapeDtypeStruct((B, 2, Cout), jnp.float32)),
        grid=(B, nT),
        in_specs=[
            pl.BlockSpec((1, Tp, Cin), lambda b, j: (b, 0, 0)),      # full padded time / batch
            pl.BlockSpec((K * Cin, Cout), lambda b, j: (0, 0)),      # bf16 weight slab
            pl.BlockSpec((1, Cout), lambda b, j: (0, 0)),            # f32 bias
        ],
        out_specs=(
            pl.BlockSpec((1, tt, Cout), lambda b, j: (b, j, 0)),     # bf16 activation
            pl.BlockSpec((1, 2, Cout), lambda b, j: (b, 0, 0)),      # f32 partial stats
        ),
        scratch_shapes=[pltpu.VMEM((win_rows, Cin), x_pad.dtype)],
        compiler_params=_compiler_params(("parallel", "arbitrary")),
    )(x_pad, w_flat, bias)


def _relu_stats(x_btc, *, tt, act_dtype):
    B, T, C = x_btc.shape
    nT = pl.cdiv(T, tt)
    kernel = functools.partial(relu_stats_kernel, tt=tt, T=T)
    return pl.pallas_call(
        kernel,
        out_shape=(jax.ShapeDtypeStruct((B, T, C), act_dtype),
                   jax.ShapeDtypeStruct((B, 2, C), jnp.float32)),
        grid=(B, nT),
        in_specs=[pl.BlockSpec((1, tt, C), lambda b, j: (b, j, 0))],
        out_specs=(
            pl.BlockSpec((1, tt, C), lambda b, j: (b, j, 0)),
            pl.BlockSpec((1, 2, C), lambda b, j: (b, 0, 0)),
        ),
        compiler_params=_compiler_params(("parallel", "arbitrary")),
    )(x_btc)


def _bn_apply_fused_transpose(act, scale, shift, *, tt2):
    B, T, C = act.shape
    nT = pl.cdiv(T, tt2)
    return pl.pallas_call(
        bn_apply_transpose_kernel,
        out_shape=jax.ShapeDtypeStruct((B, C, T), jnp.float32),
        grid=(B, nT),
        in_specs=[
            pl.BlockSpec((1, tt2, C), lambda b, j: (b, j, 0)),
            pl.BlockSpec((1, C), lambda b, j: (0, 0)),
            pl.BlockSpec((1, C), lambda b, j: (0, 0)),
        ],
        out_specs=pl.BlockSpec((1, C, tt2), lambda b, j: (b, 0, j)),
        compiler_params=_compiler_params(("parallel", "parallel")),
    )(act, scale, shift)


def _bn_apply(act, scale, shift, *, tt2):
    B, T, C = act.shape
    nT = pl.cdiv(T, tt2)
    return pl.pallas_call(
        bn_apply_kernel,
        out_shape=jax.ShapeDtypeStruct((B, T, C), jnp.float32),
        grid=(B, nT),
        in_specs=[
            pl.BlockSpec((1, tt2, C), lambda b, j: (b, j, 0)),
            pl.BlockSpec((1, C), lambda b, j: (0, 0)),
            pl.BlockSpec((1, C), lambda b, j: (0, 0)),
        ],
        out_specs=pl.BlockSpec((1, tt2, C), lambda b, j: (b, j, 0)),
        compiler_params=_compiler_params(("parallel", "parallel")),
    )(act, scale, shift)


def _fold_stats(stats, gamma, beta, *, n, eps):
    # Fold per-batch-element partial sums into BN scale/shift once in the wrapper
    # (tiny (B,2,C) XLA reduce -- hoisted out of the per-tile kernel-B body).
    tot = jnp.sum(stats, axis=0)                              # (2, C)
    mean = tot[0] / n
    var = jnp.maximum(tot[1] / n - mean * mean, 0.0)          # biased var (torch train BN)
    scale = gamma * jax.lax.rsqrt(var + eps)
    shift = beta - mean * scale
    C = gamma.shape[-1]
    return (scale.reshape(1, C).astype(jnp.float32),
            shift.reshape(1, C).astype(jnp.float32))


# ---------------------------------------------------------------------------
# Module forward
# ---------------------------------------------------------------------------
def tdnn_block_patch_forward(x, spkid, params, *, kernel_size, dilation, eps=1e-5,
                             take_patchup_branch=True, act_dtype=jnp.bfloat16):
    """TDNNBlockpatch forward.

    x:      (B, Cin, T) float32, channels-first (skip_transpose=True convention).
    params: 'w' (K, Cin, Cout) with w[k, i, o] == torch_weight[o, i, k],
            'b' (Cout,), 'gamma' (Cout,), 'beta' (Cout,).
    Returns the module's 5-tuple (y, target_a, target_b, target_reweighted, unchanged).
    """
    # TODO(synk): PatchUp (host NumPy Beta/Bernoulli/permutation mixing, mask built with
    # F.max_pool2d) and the `np.random.rand() < 0.7` branch selection are training-time
    # randomness with no deterministic Pallas equivalent; PatchUp is treated as identity
    # and the branch is selected via `take_patchup_branch`.
    # TODO(synk): BatchNorm running-stat buffer updates (stateful side effect, no impact
    # on the train-mode forward output) are not materialized.
    B, Cin, T = x.shape
    K, dil = kernel_size, dilation
    pad = dil * (K - 1) // 2
    assert (K - 1) * dil == 2 * pad, "even-kernel 'same' padding is not supported"
    assert pad < T, "reflect 'same' padding requires pad < time length"

    x_btc = jnp.transpose(x, (0, 2, 1))                 # channels-last (B, T, Cin)

    # Time tile for the stats pass: full T for short utterances, 256 rows otherwise
    # (fills the 256x256 MXU on v6e/v7x, keeps per-step VMEM small on v7x's 64 MiB).
    tt = T if T <= 256 else 256

    if take_patchup_branch:
        w, b = params["w"], params["b"]
        gamma, beta = params["gamma"], params["beta"]
        Cout = w.shape[-1]
        nT = pl.cdiv(T, tt)
        halo = (K - 1) * dil
        win_rows = -(-(tt + halo) // 16) * 16           # bf16 sublane-pack friendly
        tp_alloc = (nT - 1) * tt + win_rows

        # Reflect 'same' padding + bf16 cast done once here (XLA fuses these copies
        # with the transpose); extra zero tail keeps ragged-tile reads in bounds.
        x_pad = jnp.pad(x_btc, ((0, 0), (pad, pad), (0, 0)), mode="reflect")
        extra = tp_alloc - (T + 2 * pad)
        if extra > 0:
            x_pad = jnp.pad(x_pad, ((0, 0), (0, extra), (0, 0)))
        x_pad = x_pad.astype(jnp.bfloat16)

        w_flat = w.reshape(K * Cin, Cout).astype(jnp.bfloat16)
        act, stats = _conv_relu_stats(
            x_pad, w_flat, b.reshape(1, Cout).astype(jnp.float32),
            K=K, dil=dil, tt=tt, T=T, win_rows=win_rows, act_dtype=act_dtype)
    else:
        # Reference applies ReLU -> BN directly to the raw input on this branch.
        gamma, beta = params["gamma"], params["beta"]
        Cout = gamma.shape[-1]
        assert Cin == Cout, "non-patchup branch applies BN directly to the input"
        act, stats = _relu_stats(x_btc, tt=tt, act_dtype=act_dtype)

    scale, shift = _fold_stats(stats, gamma, beta, n=float(B * T), eps=eps)

    if T >= 128:
        # Fused output transpose: kernel B writes (B, Cout, T) directly.
        tt2 = 512 if T >= 512 else (256 if T >= 256 else 128)
        y = _bn_apply_fused_transpose(act, scale, shift, tt2=tt2)
    else:
        # Tiny-T fallback: plain elementwise apply + XLA transpose.
        y_btc = _bn_apply(act, scale, shift, tt2=T)
        y = jnp.transpose(y_btc, (0, 2, 1))

    return y, spkid, None, None, None


# ---------------------------------------------------------------------------
# Pure-JAX f32 references (conv -> ReLU -> train-mode BatchNorm1d, PatchUp = identity)
# ---------------------------------------------------------------------------
def reference_forward(x, w, b, gamma, beta, *, kernel_size, dilation, eps=1e-5):
    B, Cin, T = x.shape
    K, dil = kernel_size, dilation
    pad = dil * (K - 1) // 2
    x_btc = jnp.transpose(x, (0, 2, 1))
    xp = jnp.pad(x_btc, ((0, 0), (pad, pad), (0, 0)), mode="reflect")
    conv = jnp.broadcast_to(b.reshape(1, 1, -1), (B, T, w.shape[-1])).astype(jnp.float32)
    for k in range(K):
        conv = conv + jnp.einsum("btc,co->bto", xp[:, k * dil:k * dil + T, :], w[k],
                                 precision=jax.lax.Precision.HIGHEST)
    act = jnp.maximum(conv, 0.0)
    mean = jnp.mean(act, axis=(0, 1), keepdims=True)
    var = jnp.mean((act - mean) ** 2, axis=(0, 1), keepdims=True)   # biased (train-mode)
    y = (act - mean) * jax.lax.rsqrt(var + eps) * gamma.reshape(1, 1, -1) + beta.reshape(1, 1, -1)
    return jnp.transpose(y, (0, 2, 1))


def reference_relu_bn(x, gamma, beta, *, eps=1e-5):
    act = jnp.maximum(jnp.transpose(x, (0, 2, 1)), 0.0)
    mean = jnp.mean(act, axis=(0, 1), keepdims=True)
    var = jnp.mean((act - mean) ** 2, axis=(0, 1), keepdims=True)
    y = (act - mean) * jax.lax.rsqrt(var + eps) * gamma.reshape(1, 1, -1) + beta.reshape(1, 1, -1)
    return jnp.transpose(y, (0, 2, 1))


if __name__ == "__main__":
    key = jax.random.PRNGKey(0)
    kx, kw, kb, ks = jax.random.split(key, 4)

    # Small ECAPA-style shapes: lane-dense channel count; T=128 exercises the
    # fused-transpose BN-apply path.
    B, C, T = 2, 128, 128
    K, dil = 3, 2                        # kernel_size=3, dilation=2 -> 'same' reflect pad = 2

    x = jax.random.normal(kx, (B, C, T), jnp.float32)
    spkid = jax.random.randint(ks, (B,), 0, 10)

    params = {
        "w": 0.05 * jax.random.normal(kw, (K, C, C), jnp.float32),   # w[k,i,o] == torch W[o,i,k]
        "b": 0.05 * jax.random.normal(kb, (C,), jnp.float32),
        "gamma": jnp.ones((C,), jnp.float32),                        # BatchNorm1d default affine
        "beta": jnp.zeros((C,), jnp.float32),
    }

    # Main (patchup / conv) path.
    y, target_a, target_b, target_rw, unchanged = tdnn_block_patch_forward(
        x, spkid, params, kernel_size=K, dilation=dil, take_patchup_branch=True)
    y = jax.block_until_ready(y)
    assert y.shape == (B, C, T), y.shape
    assert bool(jnp.all(jnp.isfinite(y)))

    y_ref = reference_forward(x, params["w"], params["b"], params["gamma"], params["beta"],
                              kernel_size=K, dilation=dil)
    err = jnp.abs(y - y_ref)
    max_err, mean_err = float(jnp.max(err)), float(jnp.mean(err))
    assert max_err < 8e-2 and mean_err < 1e-2, (max_err, mean_err)   # bf16 conv + bf16 act

    # Non-patchup branch of the reference (ReLU -> BN on the raw input, conv skipped).
    y2, *_ = tdnn_block_patch_forward(x, spkid, params, kernel_size=K, dilation=dil,
                                      take_patchup_branch=False)
    y2 = jax.block_until_ready(y2)
    assert y2.shape == (B, C, T)
    assert bool(jnp.all(jnp.isfinite(y2)))
    y2_ref = reference_relu_bn(x, params["gamma"], params["beta"])
    err2 = float(jnp.max(jnp.abs(y2 - y2_ref)))
    assert err2 < 5e-2, err2

    print("KERNEL_OK")
</pallas_src>

<mosaic_0001>
module attributes {stable_mosaic.version = 11 : i64} {
  func.func @conv_relu_stats_kernel(%arg0: i32, %arg1: i32, %arg2: memref<1x144x128xbf16, #tpu.memory_space<vmem>>, %arg3: memref<384x128xbf16, #tpu.memory_space<vmem>>, %arg4: memref<1x128xf32, #tpu.memory_space<vmem>>, %arg5: memref<1x128x128xbf16, #tpu.memory_space<vmem>>, %arg6: memref<1x2x128xf32, #tpu.memory_space<vmem>>, %arg7: memref<144x128xbf16, #tpu.memory_space<vmem>>) attributes {dimension_semantics = [#tpu.dimension_semantics<parallel>, #tpu.dimension_semantics<arbitrary>], iteration_bounds = array<i64: 2, 1>, scalar_prefetch = 0 : i64, scratch_operands = 1 : i64, tpu.core_type = #tpu.core_type<tc>, window_params = [{transform_indices = @transform_0, window_bounds = array<i64: 1, 144, 128>}, {pipeline_mode = #tpu.pipeline_mode<synchronous>, transform_indices = @transform_1, window_bounds = array<i64: 384, 128>}, {pipeline_mode = #tpu.pipeline_mode<synchronous>, transform_indices = @transform_2, window_bounds = array<i64: 1, 128>}, {transform_indices = @transform_3, window_bounds = array<i64: 1, 128, 128>}, {transform_indices = @transform_4, window_bounds = array<i64: 1, 2, 128>}]} {
    %c128_i32 = arith.constant 128 : i32
    %0 = arith.muli %arg1, %c128_i32 : i32
    %1 = tpu.assume_multiple %0, 8 : i32
    %c0 = arith.constant 0 : index
    %2 = arith.index_cast %1 : i32 to index
    %c0_0 = arith.constant 0 : index
    %3 = vector.load %arg2[%c0, %2, %c0_0] : memref<1x144x128xbf16, #tpu.memory_space<vmem>>, vector<1x144x128xbf16>
    %4 = vector.shape_cast %3 : vector<1x144x128xbf16> to vector<144x128xbf16>
    %c0_1 = arith.constant 0 : index
    %c0_2 = arith.constant 0 : index
    %5 = vector.load %arg7[%c0_1, %c0_2] : memref<144x128xbf16, #tpu.memory_space<vmem>>, vector<144x128xbf16>
    tpu.vector_store %arg7[%c0_1, %c0_2], %4 {strides = array<i32>} : memref<144x128xbf16, #tpu.memory_space<vmem>>, vector<144x128xbf16>,
    %c0_3 = arith.constant 0 : index
    %c0_4 = arith.constant 0 : index
    %6 = vector.load %arg7[%c0_3, %c0_4] : memref<144x128xbf16, #tpu.memory_space<vmem>>, vector<128x128xbf16>
    %c0_5 = arith.constant 0 : index
    %c0_6 = arith.constant 0 : index
    %7 = vector.load %arg3[%c0_5, %c0_6] : memref<384x128xbf16, #tpu.memory_space<vmem>>, vector<128x128xbf16>
    %cst = arith.constant dense<0.000000e+00> : vector<128x128xf32>
    %8 = tpu.matmul %6, %7, %cst {dimension_numbers = #tpu.dot_dimension_numbers<[1], [0], [0], [1], [0, 0, 1, 1], [], []>} : vector<128x128xbf16>, vector<128x128xbf16>, vector<128x128xf32> -> vector<128x128xf32>
    %c2 = arith.constant 2 : index
    %c0_7 = arith.constant 0 : index
    %9 = vector.load %arg7[%c2, %c0_7] : memref<144x128xbf16, #tpu.memory_space<vmem>>, vector<128x128xbf16>
    %c128 = arith.constant 128 : index
    %c0_8 = arith.constant 0 : index
    %10 = vector.load %arg3[%c128, %c0_8] : memref<384x128xbf16, #tpu.memory_space<vmem>>, vector<128x128xbf16>
    %cst_9 = arith.constant dense<0.000000e+00> : vector<128x128xf32>
    %11 = tpu.matmul %9, %10, %cst_9 {dimension_numbers = #tpu.dot_dimension_numbers<[1], [0], [0], [1], [0, 0, 1, 1], [], []>} : vector<128x128xbf16>, vector<128x128xbf16>, vector<128x128xf32> -> vector<128x128xf32>
    %12 = arith.addf %8, %11 : vector<128x128xf32>
    %c4 = arith.constant 4 : index
    %c0_10 = arith.constant 0 : index
    %13 = vector.load %arg7[%c4, %c0_10] : memref<144x128xbf16, #tpu.memory_space<vmem>>, vector<128x128xbf16>
    %c256 = arith.constant 256 : index
    %c0_11 = arith.constant 0 : index
    %14 = vector.load %arg3[%c256, %c0_11] : memref<384x128xbf16, #tpu.memory_space<vmem>>, vector<128x128xbf16>
    %cst_12 = arith.constant dense<0.000000e+00> : vector<128x128xf32>
    %15 = tpu.matmul %13, %14, %cst_12 {dimension_numbers = #tpu.dot_dimension_numbers<[1], [0], [0], [1], [0, 0, 1, 1], [], []>} : vector<128x128xbf16>, vector<128x128xbf16>, vector<128x128xf32> -> vector<128x128xf32>
    %16 = arith.addf %12, %15 : vector<128x128xf32>
    %c0_13 = arith.constant 0 : index
    %c0_14 = arith.constant 0 : index
    %17 = vector.load %arg4[%c0_13, %c0_14] : memref<1x128xf32, #tpu.memory_space<vmem>>, vector<1x128xf32>
    %18 = vector.broadcast %17 : vector<1x128xf32> to vector<128x128xf32>
    %19 = arith.addf %16, %18 : vector<128x128xf32>
    %cst_15 = arith.constant 0.000000e+00 : f32
    %20 = vector.broadcast %cst_15 : f32 to vector<128x128xf32>
    %21 = arith.maximumf %19, %20 : vector<128x128xf32>
    %22 = arith.truncf %21 : vector<128x128xf32> to vector<128x128xbf16>
    %c0_16 = arith.constant 0 : index
    %c0_17 = arith.constant 0 : index
    %c0_18 = arith.constant 0 : index
    %23 = vector.load %arg5[%c0_16, %c0_17, %c0_18] : memref<1x128x128xbf16, #tpu.memory_space<vmem>>, vector<1x128x128xbf16>
    %24 = vector.shape_cast %23 : vector<1x128x128xbf16> to vector<128x128xbf16>
    %25 = vector.shape_cast %22 : vector<128x128xbf16> to vector<1x128x128xbf16>
    tpu.vector_store %arg5[%c0_16, %c0_17, %c0_18], %25 {strides = array<i32>} : memref<1x128x128xbf16, #tpu.memory_space<vmem>>, vector<1x128x128xbf16>,
    %cst_19 = arith.constant dense<0.000000e+00> : vector<128xf32>
    %26 = vector.multi_reduction <add>, %21, %cst_19 [0] : vector<128x128xf32> to vector<128xf32>
    %27 = vector.shape_cast %26 : vector<128xf32> to vector<1x128xf32>
    %28 = arith.mulf %21, %21 : vector<128x128xf32>
    %cst_20 = arith.constant dense<0.000000e+00> : vector<128xf32>
    %29 = vector.multi_reduction <add>, %28, %cst_20 [0] : vector<128x128xf32> to vector<128xf32>
    %30 = vector.shape_cast %29 : vector<128xf32> to vector<1x128xf32>
    %c0_i32 = arith.constant 0 : i32
    %31 = arith.cmpi eq, %arg1, %c0_i32 : i32
    %32 = arith.extui %31 : i1 to i32
    %c0_i32_21 = arith.constant 0 : i32
    %33 = arith.cmpi ne, %32, %c0_i32_21 : i32
    scf.if %33 {
      %c0_24 = arith.constant 0 : index
      %c0_25 = arith.constant 0 : index
      %c0_26 = arith.constant 0 : index
      %37 = vector.load %arg6[%c0_24, %c0_25, %c0_26] : memref<1x2x128xf32, #tpu.memory_space<vmem>>, vector<1x1x128xf32>
      %38 = vector.shape_cast %37 : vector<1x1x128xf32> to vector<1x128xf32>
      %39 = vector.shape_cast %27 : vector<1x128xf32> to vector<1x1x128xf32>
      tpu.vector_store %arg6[%c0_24, %c0_25, %c0_26], %39 {strides = array<i32>} : memref<1x2x128xf32, #tpu.memory_space<vmem>>, vector<1x1x128xf32>,
      %c0_27 = arith.constant 0 : index
      %c1 = arith.constant 1 : index
      %c0_28 = arith.constant 0 : index
      %40 = vector.load %arg6[%c0_27, %c1, %c0_28] : memref<1x2x128xf32, #tpu.memory_space<vmem>>, vector<1x1x128xf32>
      %41 = vector.shape_cast %40 : vector<1x1x128xf32> to vector<1x128xf32>
      %42 = vector.shape_cast %30 : vector<1x128xf32> to vector<1x1x128xf32>
      tpu.vector_store %arg6[%c0_27, %c1, %c0_28], %42 {strides = array<i32>} : memref<1x2x128xf32, #tpu.memory_space<vmem>>, vector<1x1x128xf32>,
    } else {
    }
    %c0_i32_22 = arith.constant 0 : i32
    %34 = arith.cmpi sgt, %arg1, %c0_i32_22 : i32
    %35 = arith.extui %34 : i1 to i32
    %c0_i32_23 = arith.constant 0 : i32
    %36 = arith.cmpi ne, %35, %c0_i32_23 : i32
    scf.if %36 {
      %c0_24 = arith.constant 0 : index
      %c0_25 = arith.constant 0 : index
      %c0_26 = arith.constant 0 : index
      %37 = vector.load %arg6[%c0_24, %c0_25, %c0_26] : memref<1x2x128xf32, #tpu.memory_space<vmem>>, vector<1x1x128xf32>
      %38 = vector.shape_cast %37 : vector<1x1x128xf32> to vector<1x128xf32>
      %39 = arith.addf %38, %27 : vector<1x128xf32>
      %c0_27 = arith.constant 0 : index
      %c0_28 = arith.constant 0 : index
      %c0_29 = arith.constant 0 : index
      %40 = vector.load %arg6[%c0_27, %c0_28, %c0_29] : memref<1x2x128xf32, #tpu.memory_space<vmem>>, vector<1x1x128xf32>
      %41 = vector.shape_cast %40 : vector<1x1x128xf32> to vector<1x128xf32>
      %42 = vector.shape_cast %39 : vector<1x128xf32> to vector<1x1x128xf32>
      tpu.vector_store %arg6[%c0_27, %c0_28, %c0_29], %42 {strides = array<i32>} : memref<1x2x128xf32, #tpu.memory_space<vmem>>, vector<1x1x128xf32>,
      %c0_30 = arith.constant 0 : index
      %c1 = arith.constant 1 : index
      %c0_31 = arith.constant 0 : index
      %43 = vector.load %arg6[%c0_30, %c1, %c0_31] : memref<1x2x128xf32, #tpu.memory_space<vmem>>, vector<1x1x128xf32>
      %44 = vector.shape_cast %43 : vector<1x1x128xf32> to vector<1x128xf32>
      %45 = arith.addf %44, %30 : vector<1x128xf32>
      %c0_32 = arith.constant 0 : index
      %c1_33 = arith.constant 1 : index
      %c0_34 = arith.constant 0 : index
      %46 = vector.load %arg6[%c0_32, %c1_33, %c0_34] : memref<1x2x128xf32, #tpu.memory_space<vmem>>, vector<1x1x128xf32>
      %47 = vector.shape_cast %46 : vector<1x1x128xf32> to vector<1x128xf32>
      %48 = vector.shape_cast %45 : vector<1x128xf32> to vector<1x1x128xf32>
      tpu.vector_store %arg6[%c0_32, %c1_33, %c0_34], %48 {strides = array<i32>} : memref<1x2x128xf32, #tpu.memory_space<vmem>>, vector<1x1x128xf32>,
    } else {
    }
    return
  }
  func.func @transform_0(%arg0: i32, %arg1: i32) -> (i32, i32, i32) {
    %c0_i32 = arith.constant 0 : i32
    %c0_i32_0 = arith.constant 0 : i32
    %c0_i32_1 = arith.constant 0 : i32
    return %arg0, %c0_i32, %c0_i32_0 : i32, i32, i32
  }
  func.func @transform_1(%arg0: i32, %arg1: i32) -> (i32, i32) {
    %c0_i32 = arith.constant 0 : i32
    %c0_i32_0 = arith.constant 0 : i32
    %c0_i32_1 = arith.constant 0 : i32
    return %c0_i32, %c0_i32_0 : i32, i32
  }
  func.func @transform_2(%arg0: i32, %arg1: i32) -> (i32, i32) {
    %c0_i32 = arith.constant 0 : i32
    %c0_i32_0 = arith.constant 0 : i32
    %c0_i32_1 = arith.constant 0 : i32
    return %c0_i32, %c0_i32_0 : i32, i32
  }
  func.func @transform_3(%arg0: i32, %arg1: i32) -> (i32, i32, i32) {
    %c0_i32 = arith.constant 0 : i32
    %c0_i32_0 = arith.constant 0 : i32
    return %arg0, %arg1, %c0_i32 : i32, i32, i32
  }
  func.func @transform_4(%arg0: i32, %arg1: i32) -> (i32, i32, i32) {
    %c0_i32 = arith.constant 0 : i32
    %c0_i32_0 = arith.constant 0 : i32
    %c0_i32_1 = arith.constant 0 : i32
    return %arg0, %c0_i32, %c0_i32_0 : i32, i32, i32
  }
}

</mosaic_0001>

<llo_original>
// kernel: tpu_custom_call.1
$region0: #{tpu_custom_call.1}
  #allocation0 [shape = 'u32[]', space=smem, size = 0x4, offset = 0x4, fixed_abs, tag = 'smem constant byte address 0x4 - core index']
  #allocation1 [shape = 'u32[144,128]{1,0:T(1,128)}', space=vmem, size = 0x12000, scoped, tag = 'internal scratch']
  #allocation2 [shape = 'bf16[144,128]{1,0:T(16,128)(2,1)}', space=vmem, size = 0x9000, scoped, tag = 'scratch operand']
  %s0 = inlined_call_operand.hbm [shape: bf16[2,144,128], index: 0, kind: input, shape index: {}]
  %s1 = inlined_call_operand.hbm [shape: bf16[384,128], index: 1, kind: input, shape index: {}]
  %s2 = inlined_call_operand.vmem [shape: f32[1,128], index: 2, kind: input, shape index: {}]
  %s3 = inlined_call_operand.hbm [shape: bf16[2,128,128], index: 3, kind: output, shape index: {0}]
  %s4 = inlined_call_operand.hbm [shape: f32[2,2,128], index: 4, kind: output, shape index: {1}]
  %5 = xla_tuple %s3, %s4
  %s6 = sld [smem:[#allocation0]]
  $region69: #{tpu_custom_call.1} parent=0
    _
  %s8 = ssub.s32 1, %s6
  %s9 = scalar_select 0, %s8, %s6
  $region1: #{tpu_custom_call.1} parent=0
    #allocation3 [shape = 'u8[73728]{0}', space=vmem, size = 0x12000, scoped, tag = 'input window, operand 0']
    #allocation4 [shape = 's32[2]{0}', space=sflag, size = 0x8, scoped, tag = 'scoped memory for tpu_custom_call.1']
    #allocation5 [shape = 's32[2]{0}', space=sflag, size = 0x8, scoped, tag = 'scoped memory for tpu_custom_call.1']
    #allocation6 [shape = 'u8[98304]{0}', space=vmem, size = 0x18000, scoped, tag = 'input window, operand 1, single buffered']
    #allocation7 [shape = 's32[1]{0}', space=sflag, size = 0x4, scoped, tag = 'scoped memory for tpu_custom_call.1']
    #allocation8 [shape = 'u8[65536]{0}', space=vmem, size = 0x10000, scoped, tag = 'output window, operand 0']
    #allocation9 [shape = 'u8[2048]{0}', space=vmem, size = 0x800, scoped, tag = 'output window, operand 1']
    #allocation10 [shape = 's32[2]{0}', space=sflag, size = 0x8, scoped, tag = 'scoped memory for tpu_custom_call.1']
    %10 = vsyncpa [#allocation4], 0
    %s11 = scalar_lea.sflag [#allocation4], 1
    %12 = vsyncpa %s11, 0
    %13 = vsyncpa [#allocation7], 0
    %14 = vsyncpa [#allocation5], 0
    %s15 = scalar_lea.sflag [#allocation5], 1
    %16 = vsyncpa %s15, 0
    %17 = vsyncpa [#allocation10], 0
    %s18 = scalar_lea.sflag [#allocation10], 1
    %19 = vsyncpa %s18, 0
    loop: start=0, step=1, limit=4
    $region2: #{tpu_custom_call.1} parent=1 // loop_pre_header
      _
    $region3: #{tpu_custom_call.1} parent=1 // loop_header
      %s21 = sphi 0, %s25
      %p22 = scmp.ge.s32.totalorder %s21, 4
      %s28 = sphi 0, %s40
      %s29 = sphi 0, %s36
      %s30 = sphi 0, %s28
      %s31 = sphi 0, %s29
      %s32 = sphi 0, %s30
      %s33 = sphi 0, %s31
      %s43 = sphi 0, %s45
      %s46 = sphi 0, %s43
      %s47 = sphi 0, %s46
      %s63 = sphi 0, %s47
      %s67 = sphi 0, %s67
      %s69 = sphi 0, %s67
      %s70 = sphi 0, %s69
      %s84 = sphi 0, %s70
      %s88 = sphi 0, %s88
      %s90 = sphi 0, %s88
      %s91 = sphi 0, %s90
      %s105 = sphi 0, %s91
      %s113 = sphi 0, %s115
      %s116 = sphi 0, %s113
      %s117 = sphi 0, %s116
      %s133 = sphi 0, %s117
      %s139 = sphi 0, %s141
      %s142 = sphi 0, %s139
      %s143 = sphi 0, %s142
      %s159 = sphi 0, %s143
    $region4: #{tpu_custom_call.1} parent=1 // loop_header_branch
      %24 = sbr.rel (%p22) target = $region8
    $region5: #{tpu_custom_call.1} parent=1 // loop_body
      %s26 = ssub.s32 %s21, 1
      %s27 = ssub.s32 %s21, 2
      %s34 = sadd.s32 1, %s29
      %p35 = scmp.ge.s32.totalorder %s34, 1
      %s36 = scalar_select %p35, 0, %s34
      %s37 = sadd.s32 1, %s28
      %s38 = scalar_select %p35, %s37, %s28
      %p39 = scmp.ge.s32.totalorder %s38, 2
      %s40 = scalar_select %p39, 0, %s38
      %s41 = ssub.s32 %s28, %s40
      %p42 = scmp.eq.s32.totalorder %s41, 0
      %s44 = sadd.s32 %s43, 1
      %s45 = scalar_select %p42, %s43, %s44
      %p48 = pneg %p42
      %p49 = scmp.eq.s32.totalorder %s21, 1
      %p50 = por %p48, %p49
      %p51 = scmp.ne.s32.totalorder %s43, %s46
      %p52 = scmp.eq.s32.totalorder %s21, 0
      %p53 = por %p51, %p52
      %p54 = scmp.ne.s32.totalorder %s43, %s46
      %p55 = scmp.eq.s32.totalorder %s26, 1
      %p56 = por %p54, %p55
      %p57 = scmp.ne.s32.totalorder %s46, %s47
      %p58 = scmp.eq.s32.totalorder %s26, 0
      %p59 = por %p57, %p58
      %p60 = scmp.ne.s32.totalorder %s46, %s47
      %p61 = scmp.eq.s32.totalorder %s27, 1
      %p62 = por %p60, %p61
      %p64 = scmp.ne.s32.totalorder %s47, %s63
      %p65 = scmp.eq.s32.totalorder %s27, 0
      %p66 = por %p64, %p65
      %s68 = sadd.s32 %s67, 1
      %p71 = scmp.eq.s32.totalorder %s21, 1
      %p72 = scmp.ne.s32.totalorder %s67, %s69
      %p73 = scmp.eq.s32.totalorder %s21, 0
      %p74 = por %p72, %p73
      %p75 = scmp.ne.s32.totalorder %s67, %s69
      %p76 = scmp.eq.s32.totalorder %s26, 1
      %p77 = por %p75, %p76
      %p78 = scmp.ne.s32.totalorder %s69, %s70
      %p79 = scmp.eq.s32.totalorder %s26, 0
      %p80 = por %p78, %p79
      %p81 = scmp.ne.s32.totalorder %s69, %s70
      %p82 = scmp.eq.s32.totalorder %s27, 1
      %p83 = por %p81, %p82
      %p85 = scmp.ne.s32.totalorder %s70, %s84
      %p86 = scmp.eq.s32.totalorder %s27, 0
      %p87 = por %p85, %p86
      %s89 = sadd.s32 %s88, 1
      %p92 = scmp.eq.s32.totalorder %s21, 1
      %p93 = scmp.ne.s32.totalorder %s88, %s90
      %p94 = scmp.eq.s32.totalorder %s21, 0
      %p95 = por %p93, %p94
      %p96 = scmp.ne.s32.totalorder %s88, %s90
      %p97 = scmp.eq.s32.totalorder %s26, 1
      %p98 = por %p96, %p97
      %p99 = scmp.ne.s32.totalorder %s90, %s91
      %p100 = scmp.eq.s32.totalorder %s26, 0
      %p101 = por %p99, %p100
      %p102 = scmp.ne.s32.totalorder %s90, %s91
      %p103 = scmp.eq.s32.totalorder %s27, 1
      %p104 = por %p102, %p103
      %p106 = scmp.ne.s32.totalorder %s91, %s105
      %p107 = scmp.eq.s32.totalorder %s27, 0
      %p108 = por %p106, %p107
      %s109 = ssub.s32 %s28, %s40
      %s110 = ssub.s32 %s29, %s36
      %s111 = sor.u32 %s109, %s110
      %p112 = scmp.eq.s32.totalorder %s111, 0
      %s114 = sadd.s32 %s113, 1
      %s115 = scalar_select %p112, %s113, %s114
      %p118 = pneg %p112
      %p119 = scmp.eq.s32.totalorder %s21, 1
      %p120 = por %p118, %p119
      %p121 = scmp.ne.s32.totalorder %s113, %s116
      %p122 = scmp.eq.s32.totalorder %s21, 0
      %p123 = por %p121, %p122
      %p124 = scmp.ne.s32.totalorder %s113, %s116
      %p125 = scmp.eq.s32.totalorder %s26, 1
      %p126 = por %p124, %p125
      %p127 = scmp.ne.s32.totalorder %s116, %s117
      %p128 = scmp.eq.s32.totalorder %s26, 0
      %p129 = por %p127, %p128
      %p130 = scmp.ne.s32.totalorder %s116, %s117
      %p131 = scmp.eq.s32.totalorder %s27, 1
      %p132 = por %p130, %p131
      %p134 = scmp.ne.s32.totalorder %s117, %s133
      %p135 = scmp.eq.s32.totalorder %s27, 0
      %p136 = por %p134, %p135
      %s137 = ssub.s32 %s28, %s40
      %p138 = scmp.eq.s32.totalorder %s137, 0
      %s140 = sadd.s32 %s139, 1
      %s141 = scalar_select %p138, %s139, %s140
      %p144 = pneg %p138
      %p145 = scmp.eq.s32.totalorder %s21, 1
      %p146 = por %p144, %p145
      %p147 = scmp.ne.s32.totalorder %s139, %s142
      %p148 = scmp.eq.s32.totalorder %s21, 0
      %p149 = por %p147, %p148
      %p150 = scmp.ne.s32.totalorder %s139, %s142
      %p151 = scmp.eq.s32.totalorder %s26, 1
      %p152 = por %p150, %p151
      %p153 = scmp.ne.s32.totalorder %s142, %s143
      %p154 = scmp.eq.s32.totalorder %s26, 0
      %p155 = por %p153, %p154
      %p156 = scmp.ne.s32.totalorder %s142, %s143
      %p157 = scmp.eq.s32.totalorder %s27, 1
      %p158 = por %p156, %p157
      %p160 = scmp.ne.s32.totalorder %s143, %s159
      %p161 = scmp.eq.s32.totalorder %s27, 0
      %p162 = por %p160, %p161
      %p163 = scmp.le.s32.totalorder 1, %s21
      %p164 = scmp.lt.s32.totalorder %s21, 3
      %p165 = pnand %p163, %p164
      %p166 = pneg %p165
      // Predicated region
      $region9: #{tpu_custom_call.1} parent=5 // pred_check
        _
      $region10: #{tpu_custom_call.1} parent=5 // pred_check_branch
        %168 = sbr.rel (%p165) target = $region12
      $region11: #{tpu_custom_call.1} parent=5 // pred_region
        %s169 = ssub.s32 %s21, 1
        // Predicated region
        $region13: #{tpu_custom_call.1} parent=11 // pred_check
          %p170 = pneg %p80
        $region14: #{tpu_custom_call.1} parent=11 // pred_check_branch
          %172 = sbr.rel (%p170) target = $region16
        $region15: #{tpu_custom_call.1} parent=11 // pred_region
          %s174 = ssub.s32 3072, 3072
          %175 = vsyncadd [#allocation7], %s174
          %s176 = sshll.u32 [#allocation6], 4
          %s177 = int_to_ptr.vmem [resolvable:$true] %s176
          %182 = dma.hbm_to_vmem [thread:$0]  %s1, 3072, %s177, [#allocation7], 64, 64, 4
        $region16: #{tpu_custom_call.1} parent=11 // pred_fallthru
          _
        // Predicated region
        $region17: #{tpu_custom_call.1} parent=11 // pred_check
          %p183 = pneg %p101
        $region18: #{tpu_custom_call.1} parent=11 // pred_check_branch
          %185 = sbr.rel (%p183) target = $region20
        $region19: #{tpu_custom_call.1} parent=11 // pred_region
          _
        $region20: #{tpu_custom_call.1} parent=11 // pred_fallthru
          _
      $region12: #{tpu_custom_call.1} parent=5 // pred_fallthru
        _
      %p186 = scmp.lt.s32.totalorder %s21, 2
      // Predicated region
      $region21: #{tpu_custom_call.1} parent=5 // pred_check
        %p187 = pneg %p186
      $region22: #{tpu_custom_call.1} parent=5 // pred_check_branch
        %189 = sbr.rel (%p187) target = $region24
      $region23: #{tpu_custom_call.1} parent=5 // pred_region
        // Predicated region
        $region25: #{tpu_custom_call.1} parent=23 // pred_check
          %p190 = pneg %p53
        $region26: #{tpu_custom_call.1} parent=23 // pred_check_branch
          %192 = sbr.rel (%p190) target = $region28
        $region27: #{tpu_custom_call.1} parent=23 // pred_region
          %s193 = sand.u32 %s43, 1
          %s194 = scalar_lea.sflag [#allocation4], %s193
          %s195 = sand.u32 %s43, 1
          %s196 = smul.addr %s195, 72
          %s197 = scalar_lea.vmem [#allocation3], %s196
          %s199 = ssub.s32 1152, 1152
          %200 = vsyncadd %s194, %s199
          %s201 = smul.addr %s28, 18
          %s202 = smul.addr %s201, 64
          %s203 = scalar_lea.hbm %s0, %s202
          %s204 = sshll.u32 %s197, 4
          %s205 = int_to_ptr.vmem [resolvable:$true] %s204
          %210 = dma.hbm_to_vmem [thread:$0]  %s203, 1152, %s205, %s194, 64, 64, 4
        $region28: #{tpu_custom_call.1} parent=23 // pred_fallthru
          _
      $region24: #{tpu_custom_call.1} parent=5 // pred_fallthru
        _
      %p211 = scmp.le.s32.totalorder 1, %s21
      %p212 = scmp.lt.s32.totalorder %s21, 3
      %p213 = pnand %p211, %p212
      %p214 = pneg %p213
      // Predicated region
      $region29: #{tpu_custom_call.1} parent=5 // pred_check
        _
      $region30: #{tpu_custom_call.1} parent=5 // pred_check_branch
        %216 = sbr.rel (%p213) target = $region32
      $region31: #{tpu_custom_call.1} parent=5 // pred_region
        %s217 = ssub.s32 %s21, 1
        %s218 = sand.u32 %s46, 1
        %s219 = scalar_lea.sflag [#allocation4], %s218
        %s220 = sand.u32 %s46, 1
        %s221 = smul.addr %s220, 72
        %s222 = scalar_lea.vmem [#allocation3], %s221
        // Predicated region
        $region33: #{tpu_custom_call.1} parent=31 // pred_check
          %p223 = pneg %p59
        $region34: #{tpu_custom_call.1} parent=31 // pred_check_branch
          %225 = sbr.rel (%p223) target = $region36
        $region35: #{tpu_custom_call.1} parent=31 // pred_region
          %226 = dma.done %s219, 1152
        $region36: #{tpu_custom_call.1} parent=31 // pred_fallthru
          _
        // Predicated region
        $region37: #{tpu_custom_call.1} parent=31 // pred_check
          %p227 = pneg %p80
        $region38: #{tpu_custom_call.1} parent=31 // pred_check_branch
          %229 = sbr.rel (%p227) target = $region40
        $region39: #{tpu_custom_call.1} parent=31 // pred_region
          %230 = dma.done [#allocation7], 3072
        $region40: #{tpu_custom_call.1} parent=31 // pred_fallthru
          _
        %s231 = sand.u32 %s46, 1
        %s232 = scalar_lea.sflag [#allocation4], %s231
        %s233 = sand.u32 %s46, 1
        %s234 = smul.addr %s233, 72
        %s235 = scalar_lea.vmem [#allocation3], %s234
        %p236 = pneg %p59
        %p237 = pneg %p56
        %p238 = pneg %p80
        %p239 = pneg %p77
        %p240 = pneg %p101
        %p241 = pneg %p98
        %p242 = pneg %p129
        %p243 = pneg %p126
        %s244 = sand.u32 %s116, 1
        %s245 = scalar_lea.sflag [#allocation5], %s244
        %s246 = sand.u32 %s116, 1
        %s247 = smul.addr %s246, 64
        %s248 = scalar_lea.vmem [#allocation8], %s247
        %p249 = pneg %p155
        %p250 = pneg %p152
        %s251 = sand.u32 %s142, 1
        %s252 = scalar_lea.sflag [#allocation10], %s251
        %s253 = sand.u32 %s142, 1
        %s254 = smul.addr %s253, 2
        %s255 = scalar_lea.vmem [#allocation9], %s254
        %s256 = smul.u32 16, %s31
        %s258 = smul.u32 %s31, 128
        %s259 = sshra.s32 %s258, 3
        %s260 = sand.u32 %s258, 7
        %s261 = smul.addr %s259, 4
        %s262 = scalar_lea.vmem %s222, %s261 [#allocation3]
        %v263 = vld [vmem:[%s262] sm:$0xf]
        %v264 = vld [vmem:[%s262 + $0x4] sm:$0xf]
        %v265 = vld [vmem:[%s262 + $0x8] sm:$0xf]
        %v266 = vld [vmem:[%s262 + $0xc] sm:$0xf]
        %v267 = vld [vmem:[%s262 + $0x10] sm:$0xf]
        %v268 = vld [vmem:[%s262 + $0x14] sm:$0xf]
        %v269 = vld [vmem:[%s262 + $0x18] sm:$0xf]
        %v270 = vld [vmem:[%s262 + $0x1c] sm:$0xf]
        %v271 = vld [vmem:[%s262 + $0x20] sm:$0xf]
        %v272 = vld [vmem:[%s262 + $0x24] sm:$0xf]
        %v273 = vld [vmem:[%s262 + $0x28] sm:$0xf]
        %v274 = vld [vmem:[%s262 + $0x2c] sm:$0xf]
        %v275 = vld [vmem:[%s262 + $0x30] sm:$0xf]
        %v276 = vld [vmem:[%s262 + $0x34] sm:$0xf]
        %v277 = vld [vmem:[%s262 + $0x38] sm:$0xf]
        %v278 = vld [vmem:[%s262 + $0x3c] sm:$0xf]
        %v279 = vld [vmem:[%s262 + $0x40] sm:$0xf]
        %v280 = vld [vmem:[%s262 + $0x44] sm:$0xf]
        %v299 = vunpack.c.l.b16 %v263
        %v300 = vunpack.c.l.b16 %v264
        %v301 = vunpack.c.l.b16 %v265
        %v302 = vunpack.c.l.b16 %v266
        %v303 = vunpack.c.l.b16 %v267
        %v304 = vunpack.c.l.b16 %v268
        %v305 = vunpack.c.l.b16 %v269
        %v306 = vunpack.c.l.b16 %v270
        %v307 = vunpack.c.l.b16 %v271
        %v308 = vunpack.c.l.b16 %v272
        %v309 = vunpack.c.l.b16 %v273
        %v310 = vunpack.c.l.b16 %v274
        %v311 = vunpack.c.l.b16 %v275
        %v312 = vunpack.c.l.b16 %v276
        %v313 = vunpack.c.l.b16 %v277
        %v314 = vunpack.c.l.b16 %v278
        %v315 = vunpack.c.l.b16 %v279
        %v316 = vunpack.c.l.b16 %v280
        %v317 = vpack.c.b16 %v300, %v299
        %v318 = vpack.c.b16 %v302, %v301
        %v319 = vpack.c.b16 %v304, %v303
        %v320 = vpack.c.b16 %v306, %v305
        %v321 = vpack.c.b16 %v308, %v307
        %v322 = vpack.c.b16 %v310, %v309
        %v323 = vpack.c.b16 %v312, %v311
        %v324 = vpack.c.b16 %v314, %v313
        %v325 = vpack.c.b16 %v316, %v315
        %335 = vst [vmem:[#allocation2] sm:$0xff] %v317
        %336 = vst [vmem:[#allocation2 + $0x8] sm:$0xff] %v318
        %337 = vst [vmem:[#allocation2 + $0x10] sm:$0xff] %v319
        %338 = vst [vmem:[#allocation2 + $0x18] sm:$0xff] %v320
        %339 = vst [vmem:[#allocation2 + $0x20] sm:$0xff] %v321
        %340 = vst [vmem:[#allocation2 + $0x28] sm:$0xff] %v322
        %341 = vst [vmem:[#allocation2 + $0x30] sm:$0xff] %v323
        %342 = vst [vmem:[#allocation2 + $0x38] sm:$0xff] %v324
        %343 = vst [vmem:[#allocation2 + $0x40] sm:$0xff] %v325
        %v344 = vld [vmem:[#allocation2] sm:$0xff]
        %v345 = vld [vmem:[#allocation2 + $0x8] sm:$0xff]
        %v346 = vld [vmem:[#allocation2 + $0x10] sm:$0xff]
        %v347 = vld [vmem:[#allocation2 + $0x18] sm:$0xff]
        %v348 = vld [vmem:[#allocation2 + $0x20] sm:$0xff]
        %v349 = vld [vmem:[#allocation2 + $0x28] sm:$0xff]
        %v350 = vld [vmem:[#allocation2 + $0x30] sm:$0xff]
        %v351 = vld [vmem:[#allocation2 + $0x38] sm:$0xff]
        %v352 = vld [vmem:[#allocation6] sm:$0xf]
        %v353 = vld [vmem:[#allocation6 + $0x4] sm:$0xf]
        %v354 = vld [vmem:[#allocation6 + $0x8] sm:$0xf]
        %v355 = vld [vmem:[#allocation6 + $0xc] sm:$0xf]
        %v356 = vld [vmem:[#allocation6 + $0x10] sm:$0xf]
        %v357 = vld [vmem:[#allocation6 + $0x14] sm:$0xf]
        %v358 = vld [vmem:[#allocation6 + $0x18] sm:$0xf]
        %v359 = vld [vmem:[#allocation6 + $0x1c] sm:$0xf]
        %v360 = vld [vmem:[#allocation6 + $0x20] sm:$0xf]
        %v361 = vld [vmem:[#allocation6 + $0x24] sm:$0xf]
        %v362 = vld [vmem:[#allocation6 + $0x28] sm:$0xf]
        %v363 = vld [vmem:[#allocation6 + $0x2c] sm:$0xf]
        %v364 = vld [vmem:[#allocation6 + $0x30] sm:$0xf]
        %v365 = vld [vmem:[#allocation6 + $0x34] sm:$0xf]
        %v366 = vld [vmem:[#allocation6 + $0x38] sm:$0xf]
        %v367 = vld [vmem:[#allocation6 + $0x3c] sm:$0xf]
        %v368 = vld [vmem:[#allocation2] sm:$0xfe]
        %v369 = vld [vmem:[#allocation2 + $0x8] sm:$0xff]
        %v370 = vld [vmem:[#allocation2 + $0x10] sm:$0xff]
        %v371 = vld [vmem:[#allocation2 + $0x18] sm:$0xff]
        %v372 = vld [vmem:[#allocation2 + $0x20] sm:$0xff]
        %v373 = vld [vmem:[#allocation2 + $0x28] sm:$0xff]
        %v374 = vld [vmem:[#allocation2 + $0x30] sm:$0xff]
        %v375 = vld [vmem:[#allocation2 + $0x38] sm:$0xff]
        %v376 = vld [vmem:[#allocation2 + $0x40] sm:$0x1]
        %v377 = vld [vmem:[#allocation6 + $0x40] sm:$0xf]
        %v378 = vld [vmem:[#allocation6 + $0x44] sm:$0xf]
        %v379 = vld [vmem:[#allocation6 + $0x48] sm:$0xf]
        %v380 = vld [vmem:[#allocation6 + $0x4c] sm:$0xf]
        %v381 = vld [vmem:[#allocation6 + $0x50] sm:$0xf]
        %v382 = vld [vmem:[#allocation6 + $0x54] sm:$0xf]
        %v383 = vld [vmem:[#allocation6 + $0x58] sm:$0xf]
        %v384 = vld [vmem:[#allocation6 + $0x5c] sm:$0xf]
        %v385 = vld [vmem:[#allocation6 + $0x60] sm:$0xf]
        %v386 = vld [vmem:[#allocation6 + $0x64] sm:$0xf]
        %v387 = vld [vmem:[#allocation6 + $0x68] sm:$0xf]
        %v388 = vld [vmem:[#allocation6 + $0x6c] sm:$0xf]
        %v389 = vld [vmem:[#allocation6 + $0x70] sm:$0xf]
        %v390 = vld [vmem:[#allocation6 + $0x74] sm:$0xf]
        %v391 = vld [vmem:[#allocation6 + $0x78] sm:$0xf]
        %v392 = vld [vmem:[#allocation6 + $0x7c] sm:$0xf]
        %vm402 = vcmask 1046528
        %v403 = vrot.slane %v368, 1
        %v404 = vrot.slane %v369, 1
        %v405 = vsel %vm402, %v403, %v404
        %v406 = vrot.slane %v370, 1
        %v407 = vsel %vm402, %v404, %v406
        %v408 = vrot.slane %v371, 1
        %v409 = vsel %vm402, %v406, %v408
        %v410 = vrot.slane %v372, 1
        %v411 = vsel %vm402, %v408, %v410
        %v412 = vrot.slane %v373, 1
        %v413 = vsel %vm402, %v410, %v412
        %v414 = vrot.slane %v374, 1
        %v415 = vsel %vm402, %v412, %v414
        %v416 = vrot.slane %v375, 1
        %v417 = vsel %vm402, %v414, %v416
        %v418 = vrot.slane %v376, 1
        %v419 = vsel %vm402, %v416, %v418
        %v444 = vunpack.c.l.b16 %v377
        %v445 = vunpack.c.l.b16 %v378
        %v446 = vunpack.c.l.b16 %v379
        %v447 = vunpack.c.l.b16 %v380
        %v448 = vunpack.c.l.b16 %v381
        %v449 = vunpack.c.l.b16 %v382
        %v450 = vunpack.c.l.b16 %v383
        %v451 = vunpack.c.l.b16 %v384
        %v452 = vunpack.c.l.b16 %v385
        %v453 = vunpack.c.l.b16 %v386
        %v454 = vunpack.c.l.b16 %v387
        %v455 = vunpack.c.l.b16 %v388
        %v456 = vunpack.c.l.b16 %v389
        %v457 = vunpack.c.l.b16 %v390
        %v458 = vunpack.c.l.b16 %v391
        %v459 = vunpack.c.l.b16 %v392
        %v460 = vpack.c.b16 %v445, %v444
        %v461 = vpack.c.b16 %v447, %v446
        %v462 = vpack.c.b16 %v449, %v448
        %v463 = vpack.c.b16 %v451, %v450
        %v464 = vpack.c.b16 %v453, %v452
        %v465 = vpack.c.b16 %v455, %v454
        %v466 = vpack.c.b16 %v457, %v456
        %v467 = vpack.c.b16 %v459, %v458
        %476 = vmatprep.subr.bf16.mxu0 0
        %477 = vmatpush1.bf16.msra.mxu0 %v460
        %478 = vmatprep.subr.bf16.mxu0 0
        %479 = vmatpush1.bf16.msra.mxu0 %v461
        %480 = vmatprep.subr.bf16.mxu0 0
        %481 = vmatpush1.bf16.msra.mxu0 %v462
        %482 = vmatprep.subr.bf16.mxu0 0
        %483 = vmatpush1.bf16.msra.mxu0 %v463
        %484 = vmatprep.subr.bf16.mxu0 0
        %485 = vmatpush1.bf16.msra.mxu0 %v464
        %486 = vmatprep.subr.bf16.mxu0 0
        %487 = vmatpush1.bf16.msra.mxu0 %v465
        %488 = vmatprep.subr.bf16.mxu0 0
        %489 = vmatpush1.bf16.msra.mxu0 %v466
        %490 = vmatprep.subr.bf16.mxu0 0
        %491 = vmatpush1.bf16.msra.mxu0 %v467
        %492 = vmatprep.subr.bf16.mxu0 0
        %493 = vmatpush1.bf16.msra.mxu0 0
        %494 = vmatprep.subr.bf16.mxu0 0
        %495 = vmatpush1.bf16.msra.mxu0 0
        %496 = vmatprep.subr.bf16.mxu0 0
        %497 = vmatpush1.bf16.msra.mxu0 0
        %498 = vmatprep.subr.bf16.mxu0 0
        %499 = vmatpush1.bf16.msra.mxu0 0
        %500 = vmatprep.subr.bf16.mxu0 0
        %501 = vmatpush1.bf16.msra.mxu0 0
        %502 = vmatprep.subr.bf16.mxu0 0
        %503 = vmatpush1.bf16.msra.mxu0 0
        %504 = vmatprep.subr.bf16.mxu0 0
        %505 = vmatpush1.bf16.msra.mxu0 0
        %506 = vmatprep.subr.bf16.mxu0 0
        %507 = vmatpush1.bf16.msra.mxu0 0
        %508 = vmatprep.mubr.bf16.mxu0 0
        %509 = vmatmul.mubr.bf16.gmra.mrb[0].mxu0 %v405
        %v510 = vpop.f32.mrb[0].mxu0
        %v511 = vadd.f32 0.0, %v510
        %v512 = vpop.f32.mrb[0].mxu0
        %v513 = vpop.f32.mrb[0].mxu0
        %v514 = vadd.f32 0.0, %v513
        %v515 = vpop.f32.mrb[0].mxu0
        %516 = vmatprep.mubr.bf16.mxu0 0
        %517 = vmatmul.mubr.bf16.gmra.mrb[0].mxu0 %v407
        %v518 = vpop.f32.mrb[0].mxu0
        %v519 = vadd.f32 0.0, %v518
        %v520 = vpop.f32.mrb[0].mxu0
        %v521 = vpop.f32.mrb[0].mxu0
        %v522 = vadd.f32 0.0, %v521
        %v523 = vpop.f32.mrb[0].mxu0
        %524 = vmatprep.mubr.bf16.mxu0 0
        %525 = vmatmul.mubr.bf16.gmra.mrb[0].mxu0 %v409
        %v526 = vpop.f32.mrb[0].mxu0
        %v527 = vadd.f32 0.0, %v526
        %v528 = vpop.f32.mrb[0].mxu0
        %v529 = vpop.f32.mrb[0].mxu0
        %v530 = vadd.f32 0.0, %v529
        %v531 = vpop.f32.mrb[0].mxu0
        %532 = vmatprep.mubr.bf16.mxu0 0
        %533 = vmatmul.mubr.bf16.gmra.mrb[0].mxu0 %v411
        %v534 = vpop.f32.mrb[0].mxu0
        %v535 = vadd.f32 0.0, %v534
        %v536 = vpop.f32.mrb[0].mxu0
        %v537 = vpop.f32.mrb[0].mxu0
        %v538 = vadd.f32 0.0, %v537
        %v539 = vpop.f32.mrb[0].mxu0
        %540 = vmatprep.mubr.bf16.mxu0 0
        %541 = vmatmul.mubr.bf16.gmra.mrb[0].mxu0 %v413
        %v542 = vpop.f32.mrb[0].mxu0
        %v543 = vadd.f32 0.0, %v542
        %v544 = vpop.f32.mrb[0].mxu0
        %v545 = vpop.f32.mrb[0].mxu0
        %v546 = vadd.f32 0.0, %v545
        %v547 = vpop.f32.mrb[0].mxu0
        %548 = vmatprep.mubr.bf16.mxu0 0
        %549 = vmatmul.mubr.bf16.gmra.mrb[0].mxu0 %v415
        %v550 = vpop.f32.mrb[0].mxu0
        %v551 = vadd.f32 0.0, %v550
        %v552 = vpop.f32.mrb[0].mxu0
        %v553 = vpop.f32.mrb[0].mxu0
        %v554 = vadd.f32 0.0, %v553
        %v555 = vpop.f32.mrb[0].mxu0
        %556 = vmatprep.mubr.bf16.mxu0 0
        %557 = vmatmul.mubr.bf16.gmra.mrb[0].mxu0 %v417
        %v558 = vpop.f32.mrb[0].mxu0
        %v559 = vadd.f32 0.0, %v558
        %v560 = vpop.f32.mrb[0].mxu0
        %v561 = vpop.f32.mrb[0].mxu0
        %v562 = vadd.f32 0.0, %v561
        %v563 = vpop.f32.mrb[0].mxu0
        %564 = vmatprep.mubr.bf16.mxu0 0
        %565 = vmatmul.mubr.bf16.gmra.mrb[0].mxu0 %v419
        %v566 = vpop.f32.mrb[0].mxu0
        %v567 = vadd.f32 0.0, %v566
        %v568 = vpop.f32.mrb[0].mxu0
        %v569 = vpop.f32.mrb[0].mxu0
        %v570 = vadd.f32 0.0, %v569
        %v571 = vpop.f32.mrb[0].mxu0
        %572 = vdwg.mxu0
        %v589 = vunpack.c.l.b16 %v352
        %v590 = vunpack.c.l.b16 %v353
        %v591 = vunpack.c.l.b16 %v354
        %v592 = vunpack.c.l.b16 %v355
        %v593 = vunpack.c.l.b16 %v356
        %v594 = vunpack.c.l.b16 %v357
        %v595 = vunpack.c.l.b16 %v358
        %v596 = vunpack.c.l.b16 %v359
        %v597 = vunpack.c.l.b16 %v360
        %v598 = vunpack.c.l.b16 %v361
        %v599 = vunpack.c.l.b16 %v362
        %v600 = vunpack.c.l.b16 %v363
        %v601 = vunpack.c.l.b16 %v364
        %v602 = vunpack.c.l.b16 %v365
        %v603 = vunpack.c.l.b16 %v366
        %v604 = vunpack.c.l.b16 %v367
        %v605 = vpack.c.b16 %v590, %v589
        %v606 = vpack.c.b16 %v592, %v591
        %v607 = vpack.c.b16 %v594, %v593
        %v608 = vpack.c.b16 %v596, %v595
        %v609 = vpack.c.b16 %v598, %v597
        %v610 = vpack.c.b16 %v600, %v599
        %v611 = vpack.c.b16 %v602, %v601
        %v612 = vpack.c.b16 %v604, %v603
        %621 = vmatprep.subr.bf16.mxu0 0
        %622 = vmatpush1.bf16.msra.mxu0 %v605
        %623 = vmatprep.subr.bf16.mxu0 0
        %624 = vmatpush1.bf16.msra.mxu0 %v606
        %625 = vmatprep.subr.bf16.mxu0 0
        %626 = vmatpush1.bf16.msra.mxu0 %v607
        %627 = vmatprep.subr.bf16.mxu0 0
        %628 = vmatpush1.bf16.msra.mxu0 %v608
        %629 = vmatprep.subr.bf16.mxu0 0
        %630 = vmatpush1.bf16.msra.mxu0 %v609
        %631 = vmatprep.subr.bf16.mxu0 0
        %632 = vmatpush1.bf16.msra.mxu0 %v610
        %633 = vmatprep.subr.bf16.mxu0 0
        %634 = vmatpush1.bf16.msra.mxu0 %v611
        %635 = vmatprep.subr.bf16.mxu0 0
        %636 = vmatpush1.bf16.msra.mxu0 %v612
        %637 = vmatprep.subr.bf16.mxu0 0
        %638 = vmatpush1.bf16.msra.mxu0 0
        %639 = vmatprep.subr.bf16.mxu0 0
        %640 = vmatpush1.bf16.msra.mxu0 0
        %641 = vmatprep.subr.bf16.mxu0 0
        %642 = vmatpush1.bf16.msra.mxu0 0
        %643 = vmatprep.subr.bf16.mxu0 0
        %644 = vmatpush1.bf16.msra.mxu0 0
        %645 = vmatprep.subr.bf16.mxu0 0
        %646 = vmatpush1.bf16.msra.mxu0 0
        %647 = vmatprep.subr.bf16.mxu0 0
        %648 = vmatpush1.bf16.msra.mxu0 0
        %649 = vmatprep.subr.bf16.mxu0 0
        %650 = vmatpush1.bf16.msra.mxu0 0
        %651 = vmatprep.subr.bf16.mxu0 0
        %652 = vmatpush1.bf16.msra.mxu0 0
        %653 = vmatprep.mubr.bf16.mxu0 0
        %654 = vmatmul.mubr.bf16.gmra.mrb[0].mxu0 %v344
        %v655 = vpop.f32.mrb[0].mxu0
        %v656 = vadd.f32 %v511, %v655
        %v657 = vpop.f32.mrb[0].mxu0
        %v658 = vpop.f32.mrb[0].mxu0
        %v659 = vadd.f32 %v514, %v658
        %v660 = vpop.f32.mrb[0].mxu0
        %661 = vmatprep.mubr.bf16.mxu0 0
        %662 = vmatmul.mubr.bf16.gmra.mrb[0].mxu0 %v345
        %v663 = vpop.f32.mrb[0].mxu0
        %v664 = vadd.f32 %v519, %v663
        %v665 = vpop.f32.mrb[0].mxu0
        %v666 = vpop.f32.mrb[0].mxu0
        %v667 = vadd.f32 %v522, %v666
        %v668 = vpop.f32.mrb[0].mxu0
        %669 = vmatprep.mubr.bf16.mxu0 0
        %670 = vmatmul.mubr.bf16.gmra.mrb[0].mxu0 %v346
        %v671 = vpop.f32.mrb[0].mxu0
        %v672 = vadd.f32 %v527, %v671
        %v673 = vpop.f32.mrb[0].mxu0
        %v674 = vpop.f32.mrb[0].mxu0
        %v675 = vadd.f32 %v530, %v674
        %v676 = vpop.f32.mrb[0].mxu0
        %677 = vmatprep.mubr.bf16.mxu0 0
        %678 = vmatmul.mubr.bf16.gmra.mrb[0].mxu0 %v347
        %v679 = vpop.f32.mrb[0].mxu0
        %v680 = vadd.f32 %v535, %v679
        %v681 = vpop.f32.mrb[0].mxu0
        %v682 = vpop.f32.mrb[0].mxu0
        %v683 = vadd.f32 %v538, %v682
        %v684 = vpop.f32.mrb[0].mxu0
        %685 = vmatprep.mubr.bf16.mxu0 0
        %686 = vmatmul.mubr.bf16.gmra.mrb[0].mxu0 %v348
        %v687 = vpop.f32.mrb[0].mxu0
        %v688 = vadd.f32 %v543, %v687
        %v689 = vpop.f32.mrb[0].mxu0
        %v690 = vpop.f32.mrb[0].mxu0
        %v691 = vadd.f32 %v546, %v690
        %v692 = vpop.f32.mrb[0].mxu0
        %693 = vmatprep.mubr.bf16.mxu0 0
        %694 = vmatmul.mubr.bf16.gmra.mrb[0].mxu0 %v349
        %v695 = vpop.f32.mrb[0].mxu0
        %v696 = vadd.f32 %v551, %v695
        %v697 = vpop.f32.mrb[0].mxu0
        %v698 = vpop.f32.mrb[0].mxu0
        %v699 = vadd.f32 %v554, %v698
        %v700 = vpop.f32.mrb[0].mxu0
        %701 = vmatprep.mubr.bf16.mxu0 0
        %702 = vmatmul.mubr.bf16.gmra.mrb[0].mxu0 %v350
        %v703 = vpop.f32.mrb[0].mxu0
        %v704 = vadd.f32 %v559, %v703
        %v705 = vpop.f32.mrb[0].mxu0
        %v706 = vpop.f32.mrb[0].mxu0
        %v707 = vadd.f32 %v562, %v706
        %v708 = vpop.f32.mrb[0].mxu0
        %709 = vmatprep.mubr.bf16.mxu0 0
        %710 = vmatmul.mubr.bf16.gmra.mrb[0].mxu0 %v351
        %v711 = vpop.f32.mrb[0].mxu0
        %v712 = vadd.f32 %v567, %v711
        %v713 = vpop.f32.mrb[0].mxu0
        %v714 = vpop.f32.mrb[0].mxu0
        %v715 = vadd.f32 %v570, %v714
        %v716 = vpop.f32.mrb[0].mxu0
        %717 = vdwg.mxu0
        %v718 = vld [vmem:[#allocation2] sm:$0xfc]
        %v719 = vld [vmem:[#allocation2 + $0x40] sm:$0x3]
        %v720 = vld [vmem:[#allocation6 + $0x80] sm:$0xf]
        %v721 = vld [vmem:[#allocation6 + $0x84] sm:$0xf]
        %v722 = vld [vmem:[#allocation6 + $0x88] sm:$0xf]
        %v723 = vld [vmem:[#allocation6 + $0x8c] sm:$0xf]
        %v724 = vld [vmem:[#allocation6 + $0x90] sm:$0xf]
        %v725 = vld [vmem:[#allocation6 + $0x94] sm:$0xf]
        %v726 = vld [vmem:[#allocation6 + $0x98] sm:$0xf]
        %v727 = vld [vmem:[#allocation6 + $0x9c] sm:$0xf]
        %v728 = vld [vmem:[#allocation6 + $0xa0] sm:$0xf]
        %v729 = vld [vmem:[#allocation6 + $0xa4] sm:$0xf]
        %v730 = vld [vmem:[#allocation6 + $0xa8] sm:$0xf]
        %v731 = vld [vmem:[#allocation6 + $0xac] sm:$0xf]
        %v732 = vld [vmem:[#allocation6 + $0xb0] sm:$0xf]
        %v733 = vld [vmem:[#allocation6 + $0xb4] sm:$0xf]
        %v734 = vld [vmem:[#allocation6 + $0xb8] sm:$0xf]
        %v735 = vld [vmem:[#allocation6 + $0xbc] sm:$0xf]
        %vm738 = vcmask 1045504
        %v739 = vrot.slane %v718, 2
        %v740 = vrot.slane %v369, 2
        %v741 = vsel %vm738, %v739, %v740
        %v742 = vrot.slane %v370, 2
        %v743 = vsel %vm738, %v740, %v742
        %v744 = vrot.slane %v371, 2
        %v745 = vsel %vm738, %v742, %v744
        %v746 = vrot.slane %v372, 2
        %v747 = vsel %vm738, %v744, %v746
        %v748 = vrot.slane %v373, 2
        %v749 = vsel %vm738, %v746, %v748
        %v750 = vrot.slane %v374, 2
        %v751 = vsel %vm738, %v748, %v750
        %v752 = vrot.slane %v375, 2
        %v753 = vsel %vm738, %v750, %v752
        %v754 = vrot.slane %v719, 2
        %v755 = vsel %vm738, %v752, %v754
        %v780 = vunpack.c.l.b16 %v720
        %v781 = vunpack.c.l.b16 %v721
        %v782 = vunpack.c.l.b16 %v722
        %v783 = vunpack.c.l.b16 %v723
        %v784 = vunpack.c.l.b16 %v724
        %v785 = vunpack.c.l.b16 %v725
        %v786 = vunpack.c.l.b16 %v726
        %v787 = vunpack.c.l.b16 %v727
        %v788 = vunpack.c.l.b16 %v728
        %v789 = vunpack.c.l.b16 %v729
        %v790 = vunpack.c.l.b16 %v730
        %v791 = vunpack.c.l.b16 %v731
        %v792 = vunpack.c.l.b16 %v732
        %v793 = vunpack.c.l.b16 %v733
        %v794 = vunpack.c.l.b16 %v734
        %v795 = vunpack.c.l.b16 %v735
        %v796 = vpack.c.b16 %v781, %v780
        %v797 = vpack.c.b16 %v783, %v782
        %v798 = vpack.c.b16 %v785, %v784
        %v799 = vpack.c.b16 %v787, %v786
        %v800 = vpack.c.b16 %v789, %v788
        %v801 = vpack.c.b16 %v791, %v790
        %v802 = vpack.c.b16 %v793, %v792
        %v803 = vpack.c.b16 %v795, %v794
        %812 = vmatprep.subr.bf16.mxu0 0
        %813 = vmatpush1.bf16.msra.mxu0 %v796
        %814 = vmatprep.subr.bf16.mxu0 0
        %815 = vmatpush1.bf16.msra.mxu0 %v797
        %816 = vmatprep.subr.bf16.mxu0 0
        %817 = vmatpush1.bf16.msra.mxu0 %v798
        %818 = vmatprep.subr.bf16.mxu0 0
        %819 = vmatpush1.bf16.msra.mxu0 %v799
        %820 = vmatprep.subr.bf16.mxu0 0
        %821 = vmatpush1.bf16.msra.mxu0 %v800
        %822 = vmatprep.subr.bf16.mxu0 0
        %823 = vmatpush1.bf16.msra.mxu0 %v801
        %824 = vmatprep.subr.bf16.mxu0 0
        %825 = vmatpush1.bf16.msra.mxu0 %v802
        %826 = vmatprep.subr.bf16.mxu0 0
        %827 = vmatpush1.bf16.msra.mxu0 %v803
        %828 = vmatprep.subr.bf16.mxu0 0
        %829 = vmatpush1.bf16.msra.mxu0 0
        %830 = vmatprep.subr.bf16.mxu0 0
        %831 = vmatpush1.bf16.msra.mxu0 0
        %832 = vmatprep.subr.bf16.mxu0 0
        %833 = vmatpush1.bf16.msra.mxu0 0
        %834 = vmatprep.subr.bf16.mxu0 0
        %835 = vmatpush1.bf16.msra.mxu0 0
        %836 = vmatprep.subr.bf16.mxu0 0
        %837 = vmatpush1.bf16.msra.mxu0 0
        %838 = vmatprep.subr.bf16.mxu0 0
        %839 = vmatpush1.bf16.msra.mxu0 0
        %840 = vmatprep.subr.bf16.mxu0 0
        %841 = vmatpush1.bf16.msra.mxu0 0
        %842 = vmatprep.subr.bf16.mxu0 0
        %843 = vmatpush1.bf16.msra.mxu0 0
        %844 = vmatprep.mubr.bf16.mxu0 0
        %845 = vmatmul.mubr.bf16.gmra.mrb[0].mxu0 %v741
        %v846 = vpop.f32.mrb[0].mxu0
        %v847 = vadd.f32 0.0, %v846
        %v848 = vpop.f32.mrb[0].mxu0
        %v849 = vpop.f32.mrb[0].mxu0
        %v850 = vadd.f32 0.0, %v849
        %v851 = vpop.f32.mrb[0].mxu0
        %852 = vmatprep.mubr.bf16.mxu0 0
        %853 = vmatmul.mubr.bf16.gmra.mrb[0].mxu0 %v743
        %v854 = vpop.f32.mrb[0].mxu0
        %v855 = vadd.f32 0.0, %v854
        %v856 = vpop.f32.mrb[0].mxu0
        %v857 = vpop.f32.mrb[0].mxu0
        %v858 = vadd.f32 0.0, %v857
        %v859 = vpop.f32.mrb[0].mxu0
        %860 = vmatprep.mubr.bf16.mxu0 0
        %861 = vmatmul.mubr.bf16.gmra.mrb[0].mxu0 %v745
        %v862 = vpop.f32.mrb[0].mxu0
        %v863 = vadd.f32 0.0, %v862
        %v864 = vpop.f32.mrb[0].mxu0
        %v865 = vpop.f32.mrb[0].mxu0
        %v866 = vadd.f32 0.0, %v865
        %v867 = vpop.f32.mrb[0].mxu0
        %868 = vmatprep.mubr.bf16.mxu0 0
        %869 = vmatmul.mubr.bf16.gmra.mrb[0].mxu0 %v747
        %v870 = vpop.f32.mrb[0].mxu0
        %v871 = vadd.f32 0.0, %v870
        %v872 = vpop.f32.mrb[0].mxu0
        %v873 = vpop.f32.mrb[0].mxu0
        %v874 = vadd.f32 0.0, %v873
        %v875 = vpop.f32.mrb[0].mxu0
        %876 = vmatprep.mubr.bf16.mxu0 0
        %877 = vmatmul.mubr.bf16.gmra.mrb[0].mxu0 %v749
        %v878 = vpop.f32.mrb[0].mxu0
        %v879 = vadd.f32 0.0, %v878
        %v880 = vpop.f32.mrb[0].mxu0
        %v881 = vpop.f32.mrb[0].mxu0
        %v882 = vadd.f32 0.0, %v881
        %v883 = vpop.f32.mrb[0].mxu0
        %884 = vmatprep.mubr.bf16.mxu0 0
        %885 = vmatmul.mubr.bf16.gmra.mrb[0].mxu0 %v751
        %v886 = vpop.f32.mrb[0].mxu0
        %v887 = vadd.f32 0.0, %v886
        %v888 = vpop.f32.mrb[0].mxu0
        %v889 = vpop.f32.mrb[0].mxu0
        %v890 = vadd.f32 0.0, %v889
        %v891 = vpop.f32.mrb[0].mxu0
        %892 = vmatprep.mubr.bf16.mxu0 0
        %893 = vmatmul.mubr.bf16.gmra.mrb[0].mxu0 %v753
        %v894 = vpop.f32.mrb[0].mxu0
        %v895 = vadd.f32 0.0, %v894
        %v896 = vpop.f32.mrb[0].mxu0
        %v897 = vpop.f32.mrb[0].mxu0
        %v898 = vadd.f32 0.0, %v897
        %v899 = vpop.f32.mrb[0].mxu0
        %900 = vmatprep.mubr.bf16.mxu0 0
        %901 = vmatmul.mubr.bf16.gmra.mrb[0].mxu0 %v755
        %v902 = vpop.f32.mrb[0].mxu0
        %v903 = vadd.f32 0.0, %v902
        %v904 = vpop.f32.mrb[0].mxu0
        %v905 = vpop.f32.mrb[0].mxu0
        %v906 = vadd.f32 0.0, %v905
        %v907 = vpop.f32.mrb[0].mxu0
        %908 = vdwg.mxu0
        %v909 = vadd.f32 %v656, %v847
        %v910 = vadd.f32 %v659, %v850
        %v911 = vadd.f32 %v664, %v855
        %v912 = vadd.f32 %v667, %v858
        %v913 = vadd.f32 %v672, %v863
        %v914 = vadd.f32 %v675, %v866
        %v915 = vadd.f32 %v680, %v871
        %v916 = vadd.f32 %v683, %v874
        %v917 = vadd.f32 %v688, %v879
        %v918 = vadd.f32 %v691, %v882
        %v919 = vadd.f32 %v696, %v887
        %v920 = vadd.f32 %v699, %v890
        %v921 = vadd.f32 %v704, %v895
        %v922 = vadd.f32 %v707, %v898
        %v923 = vadd.f32 %v712, %v903
        %v924 = vadd.f32 %v715, %v906
        %v925 = vld [vmem:[%s2] sm:$0x1]
        %v927 = vlaneseq
        %v928 = vshrl.u32 %v927, 7
        %v929 = vsub.s32 0, %v928
        %v930 = vrot.slane %v925, %v929
        %v932 = vadd.f32 %v909, %v930
        %v933 = vadd.f32 %v910, %v930
        %v934 = vadd.f32 %v911, %v930
        %v935 = vadd.f32 %v912, %v930
        %v936 = vadd.f32 %v913, %v930
        %v937 = vadd.f32 %v914, %v930
        %v938 = vadd.f32 %v915, %v930
        %v939 = vadd.f32 %v916, %v930
        %v940 = vadd.f32 %v917, %v930
        %v941 = vadd.f32 %v918, %v930
        %v942 = vadd.f32 %v919, %v930
        %v943 = vadd.f32 %v920, %v930
        %v944 = vadd.f32 %v921, %v930
        %v945 = vadd.f32 %v922, %v930
        %v946 = vadd.f32 %v923, %v930
        %v947 = vadd.f32 %v924, %v930
        %v948 = vmax.f32 %v932, 0.0
        %v949 = vmax.f32 %v933, 0.0
        %v950 = vmax.f32 %v934, 0.0
        %v951 = vmax.f32 %v935, 0.0
        %v952 = vmax.f32 %v936, 0.0
        %v953 = vmax.f32 %v937, 0.0
        %v954 = vmax.f32 %v938, 0.0
        %v955 = vmax.f32 %v939, 0.0
        %v956 = vmax.f32 %v940, 0.0
        %v957 = vmax.f32 %v941, 0.0
        %v958 = vmax.f32 %v942, 0.0
        %v959 = vmax.f32 %v943, 0.0
        %v960 = vmax.f32 %v944, 0.0
        %v961 = vmax.f32 %v945, 0.0
        %v962 = vmax.f32 %v946, 0.0
        %v963 = vmax.f32 %v947, 0.0
        %v964 = vpack.c.bf16 %v949, %v948
        %v965 = vpack.c.bf16 %v951, %v950
        %v966 = vpack.c.bf16 %v953, %v952
        %v967 = vpack.c.bf16 %v955, %v954
        %v968 = vpack.c.bf16 %v957, %v956
        %v969 = vpack.c.bf16 %v959, %v958
        %v970 = vpack.c.bf16 %v961, %v960
        %v971 = vpack.c.bf16 %v963, %v962
        %v980 = vunpack.c.l.b16 %v964
        %v981 = vunpack.c.h.b16 %v964
        %v982 = vunpack.c.l.b16 %v965
        %v983 = vunpack.c.h.b16 %v965
        %v984 = vunpack.c.l.b16 %v966
        %v985 = vunpack.c.h.b16 %v966
        %v986 = vunpack.c.l.b16 %v967
        %v987 = vunpack.c.h.b16 %v967
        %v988 = vunpack.c.l.b16 %v968
        %v989 = vunpack.c.h.b16 %v968
        %v990 = vunpack.c.l.b16 %v969
        %v991 = vunpack.c.h.b16 %v969
        %v992 = vunpack.c.l.b16 %v970
        %v993 = vunpack.c.h.b16 %v970
        %v994 = vunpack.c.l.b16 %v971
        %v995 = vunpack.c.h.b16 %v971
        %v996 = vpack.c.b16 %v980, %v980
        %v997 = vpack.c.b16 %v981, %v981
        %v998 = vpack.c.b16 %v982, %v982
        %v999 = vpack.c.b16 %v983, %v983
        %v1000 = vpack.c.b16 %v984, %v984
        %v1001 = vpack.c.b16 %v985, %v985
        %v1002 = vpack.c.b16 %v986, %v986
        %v1003 = vpack.c.b16 %v987, %v987
        %v1004 = vpack.c.b16 %v988, %v988
        %v1005 = vpack.c.b16 %v989, %v989
        %v1006 = vpack.c.b16 %v990, %v990
        %v1007 = vpack.c.b16 %v991, %v991
        %v1008 = vpack.c.b16 %v992, %v992
        %v1009 = vpack.c.b16 %v993, %v993
        %v1010 = vpack.c.b16 %v994, %v994
        %v1011 = vpack.c.b16 %v995, %v995
        %1028 = vst [vmem:[%s248] sm:$0xf] %v996
        %1029 = vst [vmem:[%s248 + $0x4] sm:$0xf] %v997
        %1030 = vst [vmem:[%s248 + $0x8] sm:$0xf] %v998
        %1031 = vst [vmem:[%s248 + $0xc] sm:$0xf] %v999
        %1032 = vst [vmem:[%s248 + $0x10] sm:$0xf] %v1000
        %1033 = vst [vmem:[%s248 + $0x14] sm:$0xf] %v1001
        %1034 = vst [vmem:[%s248 + $0x18] sm:$0xf] %v1002
        %1035 = vst [vmem:[%s248 + $0x1c] sm:$0xf] %v1003
        %1036 = vst [vmem:[%s248 + $0x20] sm:$0xf] %v1004
        %1037 = vst [vmem:[%s248 + $0x24] sm:$0xf] %v1005
        %1038 = vst [vmem:[%s248 + $0x28] sm:$0xf] %v1006
        %1039 = vst [vmem:[%s248 + $0x2c] sm:$0xf] %v1007
        %1040 = vst [vmem:[%s248 + $0x30] sm:$0xf] %v1008
        %1041 = vst [vmem:[%s248 + $0x34] sm:$0xf] %v1009
        %1042 = vst [vmem:[%s248 + $0x38] sm:$0xf] %v1010
        %1043 = vst [vmem:[%s248 + $0x3c] sm:$0xf] %v1011
        %v1044 = vadd.f32 %v948, %v949
        %v1045 = vadd.f32 %v1044, %v950
        %v1046 = vadd.f32 %v1045, %v951
        %v1047 = vadd.f32 %v1046, %v952
        %v1048 = vadd.f32 %v1047, %v953
        %v1049 = vadd.f32 %v1048, %v954
        %v1050 = vadd.f32 %v1049, %v955
        %v1051 = vadd.f32 %v1050, %v956
        %v1052 = vadd.f32 %v1051, %v957
        %v1053 = vadd.f32 %v1052, %v958
        %v1054 = vadd.f32 %v1053, %v959
        %v1055 = vadd.f32 %v1054, %v960
        %v1056 = vadd.f32 %v1055, %v961
        %v1057 = vadd.f32 %v1056, %v962
        %v1058 = vadd.f32 %v1057, %v963
        %v1059 = vrot.slane %v1058, 4
        %v1060 = vadd.f32 %v1058, %v1059
        %v1061 = vrot.slane %v1060, 2
        %v1062 = vadd.f32 %v1060, %v1061
        %v1063 = vrot.slane %v1062, 1
        %v1064 = vadd.f32 %v1062, %v1063
        %v1065 = vmul.f32 %v948, %v948
        %v1066 = vmul.f32 %v949, %v949
        %v1067 = vmul.f32 %v950, %v950
        %v1068 = vmul.f32 %v951, %v951
        %v1069 = vmul.f32 %v952, %v952
        %v1070 = vmul.f32 %v953, %v953
        %v1071 = vmul.f32 %v954, %v954
        %v1072 = vmul.f32 %v955, %v955
        %v1073 = vmul.f32 %v956, %v956
        %v1074 = vmul.f32 %v957, %v957
        %v1075 = vmul.f32 %v958, %v958
        %v1076 = vmul.f32 %v959, %v959
        %v1077 = vmul.f32 %v960, %v960
        %v1078 = vmul.f32 %v961, %v961
        %v1079 = vmul.f32 %v962, %v962
        %v1080 = vmul.f32 %v963, %v963
        %v1081 = vadd.f32 %v1065, %v1066
        %v1082 = vadd.f32 %v1081, %v1067
        %v1083 = vadd.f32 %v1082, %v1068
        %v1084 = vadd.f32 %v1083, %v1069
        %v1085 = vadd.f32 %v1084, %v1070
        %v1086 = vadd.f32 %v1085, %v1071
        %v1087 = vadd.f32 %v1086, %v1072
        %v1088 = vadd.f32 %v1087, %v1073
        %v1089 = vadd.f32 %v1088, %v1074
        %v1090 = vadd.f32 %v1089, %v1075
        %v1091 = vadd.f32 %v1090, %v1076
        %v1092 = vadd.f32 %v1091, %v1077
        %v1093 = vadd.f32 %v1092, %v1078
        %v1094 = vadd.f32 %v1093, %v1079
        %v1095 = vadd.f32 %v1094, %v1080
        %v1096 = vrot.slane %v1095, 4
        %v1097 = vadd.f32 %v1095, %v1096
        %v1098 = vrot.slane %v1097, 2
        %v1099 = vadd.f32 %v1097, %v1098
        %v1100 = vrot.slane %v1099, 1
        %v1101 = vadd.f32 %v1099, %v1100
        %p1102 = scmp.eq.s32.totalorder %s31, 0
        // Predicated region
        $region41: #{tpu_custom_call.1} parent=31 // pred_check
          %p1103 = pneg %p1102
        $region42: #{tpu_custom_call.1} parent=31 // pred_check_branch
          %1105 = sbr.rel (%p1103) target = $region44
        $region43: #{tpu_custom_call.1} parent=31 // pred_region
          %1106 = vst [vmem:[%s255] sm:$0x1] %v1064
          %1107 = vst [vmem:[%s255 + $0x1] sm:$0x1] %v1101
        $region44: #{tpu_custom_call.1} parent=31 // pred_fallthru
          _
        %p1108 = scmp.gt.s32.totalorder %s31, 0
        // Predicated region
        $region45: #{tpu_custom_call.1} parent=31 // pred_check
          %p1109 = pneg %p1108
        $region46: #{tpu_custom_call.1} parent=31 // pred_check_branch
          %1111 = sbr.rel (%p1109) target = $region48
        $region47: #{tpu_custom_call.1} parent=31 // pred_region
          %v1112 = vld [vmem:[%s255] sm:$0x1]
          %v1113 = vadd.f32 %v1112, %v1064
          %1114 = vst [vmem:[%s255] sm:$0x1] %v1113
          %v1115 = vld [vmem:[%s255 + $0x1] sm:$0x1]
          %v1116 = vadd.f32 %v1115, %v1101
          %1117 = vst [vmem:[%s255 + $0x1] sm:$0x1] %v1116
        $region48: #{tpu_custom_call.1} parent=31 // pred_fallthru
          _
        %s1118 = sand.u32 %s116, 1
        %s1119 = scalar_lea.sflag [#allocation5], %s1118
        %s1120 = sand.u32 %s116, 1
        %s1121 = smul.addr %s1120, 64
        %s1122 = scalar_lea.vmem [#allocation8], %s1121
        %s1123 = sand.u32 %s142, 1
        %s1124 = scalar_lea.sflag [#allocation10], %s1123
        %s1125 = sand.u32 %s142, 1
        %s1126 = smul.addr %s1125, 2
        %s1127 = scalar_lea.vmem [#allocation9], %s1126
        // Predicated region
        $region49: #{tpu_custom_call.1} parent=31 // pred_check
          %p1128 = pneg %p126
        $region50: #{tpu_custom_call.1} parent=31 // pred_check_branch
          %1130 = sbr.rel (%p1128) target = $region52
        $region51: #{tpu_custom_call.1} parent=31 // pred_region
          %s1131 = smul.u32 16, %s31
          %s1133 = ssub.s32 1024, 1024
          %1134 = vsyncadd %s1119, %s1133
          %s1135 = smul.addr %s30, 16
          %s1136 = sadd.s32 %s1131, %s1135
          %s1137 = smul.addr %s1136, 64
          %s1138 = scalar_lea.hbm %s3, %s1137
          %s1139 = sshll.u32 %s1122, 4
          %s1140 = int_to_ptr.vmem [resolvable:$true] %s1139
          %1145 = dma.vmem_to_hbm [thread:$0]  %s1140, 1024, %s1138, %s1119, 64, 64, 4
        $region52: #{tpu_custom_call.1} parent=31 // pred_fallthru
          _
        // Predicated region
        $region53: #{tpu_custom_call.1} parent=31 // pred_check
          %p1146 = pneg %p152
        $region54: #{tpu_custom_call.1} parent=31 // pred_check_branch
          %1148 = sbr.rel (%p1146) target = $region56
        $region55: #{tpu_custom_call.1} parent=31 // pred_region
          %s1150 = ssub.s32 32, 32
          %1151 = vsyncadd %s1124, %s1150
          %s1152 = smul.addr %s30, 32
          %s1153 = scalar_lea.hbm %s4, %s1152
          %s1155 = sshll.u32 %s1127, 4
          %s1156 = int_to_ptr.vmem [resolvable:$true] %s1155
          %1158 = dma.vmem_to_hbm [thread:$0]  %s1156, 32, %s1153, %s1124
        $region56: #{tpu_custom_call.1} parent=31 // pred_fallthru
          _
      $region32: #{tpu_custom_call.1} parent=5 // pred_fallthru
        _
      %p1159 = scmp.le.s32.totalorder 2, %s21
      // Predicated region
      $region57: #{tpu_custom_call.1} parent=5 // pred_check
        %p1160 = pneg %p1159
      $region58: #{tpu_custom_call.1} parent=5 // pred_check_branch
        %1162 = sbr.rel (%p1160) target = $region60
      $region59: #{tpu_custom_call.1} parent=5 // pred_region
        %s1163 = ssub.s32 %s21, 2
        // Predicated region
        $region61: #{tpu_custom_call.1} parent=59 // pred_check
          %p1164 = pneg %p132
        $region62: #{tpu_custom_call.1} parent=59 // pred_check_branch
          %1166 = sbr.rel (%p1164) target = $region64
        $region63: #{tpu_custom_call.1} parent=59 // pred_region
          %s1167 = sand.u32 %s117, 1
          %s1168 = scalar_lea.sflag [#allocation5], %s1167
          %s1169 = sand.u32 %s117, 1
          %s1170 = smul.addr %s1169, 64
          %s1171 = scalar_lea.vmem [#allocation8], %s1170
          %1172 = dma.done %s1168, 1024
        $region64: #{tpu_custom_call.1} parent=59 // pred_fallthru
          _
        // Predicated region
        $region65: #{tpu_custom_call.1} parent=59 // pred_check
          %p1173 = pneg %p158
        $region66: #{tpu_custom_call.1} parent=59 // pred_check_branch
          %1175 = sbr.rel (%p1173) target = $region68
        $region67: #{tpu_custom_call.1} parent=59 // pred_region
          %s1176 = sand.u32 %s143, 1
          %s1177 = scalar_lea.sflag [#allocation10], %s1176
          %s1178 = sand.u32 %s143, 1
          %s1179 = smul.addr %s1178, 2
          %s1180 = scalar_lea.vmem [#allocation9], %s1179
          %1181 = dma.done %s1177, 32
        $region68: #{tpu_custom_call.1} parent=59 // pred_fallthru
          _
      $region60: #{tpu_custom_call.1} parent=5 // pred_fallthru
        _
    $region6: #{tpu_custom_call.1} parent=1 // loop_footer
      %s25 = sadd.s32 1, %s21
    $region7: #{tpu_custom_call.1} parent=1 // loop_footer_branch
      %20 = sbr.rel target = $region3
    $region8: #{tpu_custom_call.1} parent=1 // loop_exit
      _
    %1182 = vsyncpa [#allocation4], 1
    %s1183 = scalar_lea.sflag [#allocation4], 1
    %1184 = vsyncpa %s1183, 1
    %1185 = vsyncpa [#allocation7], 1
    %1186 = vsyncpa [#allocation5], 1
    %s1187 = scalar_lea.sflag [#allocation5], 1
    %1188 = vsyncpa %s1187, 1
    %1189 = vsyncpa [#allocation10], 1
    %s1190 = scalar_lea.sflag [#allocation10], 1
    %1191 = vsyncpa %s1190, 1

</llo_original>
